<compile_context>
chip_gen: v5e
topology: v5e:2x2
jax: 0.10.0
libtpu: 0.0.40
codegen_flags: <defaults>
</compile_context>

<pallas_src>
import functools

import jax
import jax.numpy as jnp
from jax.experimental import pallas as pl
from jax.experimental.pallas import tpu as pltpu

LAYER_SIZE = 128
IN_FEATURES = 2
OUT_FEATURES = 2
PAD_OUT = 128  # lane-dense padded width for the final layer (multiple of 128)


def mlp_kernel(x_ref, w1_ref, b1_ref, w2_ref, b2_ref, w3_ref, b3_ref, o_ref):
    """relu(relu(x@W1+b1)@W2+b2)@W3+b3 with W3/b3 zero-padded to 128 cols."""
    x = x_ref[...]          # [bb, 2]  f32
    w1 = w1_ref[...]        # [2, 128] f32

    # Layer 1 on the VPU: a K=2 contraction would waste an MXU pass, so do two
    # broadcast FMAs instead.
    h1 = x[:, 0:1] * w1[0:1, :] + x[:, 1:2] * w1[1:2, :] + b1_ref[...]
    h1 = jnp.maximum(h1, 0.0)                                   # f32 ReLU

    # Layer 2 on the MXU: bf16 operands, f32 accumulation.
    h2 = jnp.dot(h1.astype(jnp.bfloat16), w2_ref[...],
                 preferred_element_type=jnp.float32) + b2_ref[...]
    h2 = jnp.maximum(h2, 0.0)                                   # f32 ReLU

    # Layer 3 on the MXU against the padded [128, 128] bf16 weight -> the
    # output tile is [bb, 128] (lane-dense, unmasked stores).
    out = jnp.dot(h2.astype(jnp.bfloat16), w3_ref[...],
                  preferred_element_type=jnp.float32) + b3_ref[...]
    o_ref[...] = out.astype(o_ref.dtype)


@functools.partial(jax.jit, static_argnames=("block_b",))
def neural_net_forward(x, w1, b1, w2, b2, w3, b3, *, block_b=512):
    B = x.shape[0]

    # Zero-pad layer-3 weight/bias out to 128 lanes (wrapper slices back later).
    w3p = jnp.zeros((LAYER_SIZE, PAD_OUT), w3.dtype).at[:, :OUT_FEATURES].set(w3)
    b3p = jnp.zeros((1, PAD_OUT), b3.dtype).at[:, :OUT_FEATURES].set(b3)

    # Batch tiling: big tiles to amortize the ~0.35us/step pipeline overhead
    # and fill the MXU M dimension; shrink to the whole batch when B is small.
    bb = min(block_b, B)
    nb = pl.cdiv(B, bb)
    B_pad = nb * bb
    x_in = x if B_pad == B else jnp.zeros((B_pad, IN_FEATURES), x.dtype).at[:B].set(x)

    # Replicated (constant-block) specs for weights/biases.
    def rep(arr):
        return pl.BlockSpec(arr.shape, lambda i: (0, 0))

    grid_spec = pl.GridSpec(
        grid=(nb,),
        in_specs=[
            pl.BlockSpec((bb, IN_FEATURES), lambda i: (i, 0)),
            rep(w1), rep(b1), rep(w2), rep(b2), rep(w3p), rep(b3p),
        ],
        out_specs=pl.BlockSpec((bb, PAD_OUT), lambda i: (i, 0)),
    )

    flops = 2 * B_pad * (IN_FEATURES * LAYER_SIZE
                         + LAYER_SIZE * LAYER_SIZE
                         + LAYER_SIZE * PAD_OUT)
    bytes_accessed = (x_in.size * 4 + B_pad * PAD_OUT * 4
                      + w1.size * 4 + b1.size * 4
                      + w2.size * 2 + b2.size * 4
                      + w3p.size * 2 + b3p.size * 4)

    out_pad = pl.pallas_call(
        mlp_kernel,
        out_shape=jax.ShapeDtypeStruct((B_pad, PAD_OUT), jnp.float32),
        grid_spec=grid_spec,
        compiler_params=pltpu.CompilerParams(
            dimension_semantics=("parallel",),  # shards batch tiles across TCs (v7x)
        ),
        cost_estimate=pl.CostEstimate(
            flops=flops, transcendentals=0, bytes_accessed=bytes_accessed),
    )(x_in, w1, b1, w2, b2, w3p, b3p)

    return out_pad[:B, :OUT_FEATURES]


def init_params(key, layer_size=LAYER_SIZE):
    """nn.Linear-style init. Weights stored transposed ([in, out]); the MXU
    layers' weights are kept in bf16, layer-1 weight and all biases in f32."""
    ks = jax.random.split(key, 6)

    def linear(kw, kb, fan_in, fan_out, w_dtype=jnp.float32):
        bound = 1.0 / (fan_in ** 0.5)   # torch default: U(-1/sqrt(fan_in), +)
        w = jax.random.uniform(kw, (fan_in, fan_out), jnp.float32, -bound, bound)
        b = jax.random.uniform(kb, (1, fan_out), jnp.float32, -bound, bound)
        return w.astype(w_dtype), b

    w1, b1 = linear(ks[0], ks[1], IN_FEATURES, layer_size)                 # VPU layer: f32
    w2, b2 = linear(ks[2], ks[3], layer_size, layer_size, jnp.bfloat16)    # MXU layer: bf16
    w3, b3 = linear(ks[4], ks[5], layer_size, OUT_FEATURES, jnp.bfloat16)  # MXU layer: bf16
    return w1, b1, w2, b2, w3, b3


if __name__ == "__main__":
    key = jax.random.PRNGKey(0)
    k_x, k_p = jax.random.split(key)

    B = 64  # small test batch; block_b automatically shrinks to B
    x = jax.random.normal(k_x, (B, IN_FEATURES), dtype=jnp.float32)
    params = init_params(k_p)

    out = neural_net_forward(x, *params)
    out = jax.block_until_ready(out)

    # Plain-JAX reference mirroring the kernel's math (same bf16 operand casts,
    # f32 accumulation), so the comparison is tight.
    w1, b1, w2, b2, w3, b3 = params
    h1 = jnp.maximum(x[:, 0:1] * w1[0:1, :] + x[:, 1:2] * w1[1:2, :] + b1, 0.0)
    h2 = jnp.maximum(
        jnp.dot(h1.astype(jnp.bfloat16), w2, preferred_element_type=jnp.float32) + b2, 0.0)
    ref = jnp.dot(h2.astype(jnp.bfloat16), w3, preferred_element_type=jnp.float32) + b3

    assert out.shape == (B, OUT_FEATURES)
    assert jnp.allclose(out, ref, atol=1e-3, rtol=1e-3), float(jnp.max(jnp.abs(out - ref)))

    print("KERNEL_OK")
</pallas_src>

<mosaic_0001>
module attributes {stable_mosaic.version = 11 : i64} {
  func.func @mlp_kernel(%arg0: i32, %arg1: memref<64x2xf32, #tpu.memory_space<vmem>>, %arg2: memref<2x128xf32, #tpu.memory_space<vmem>>, %arg3: memref<1x128xf32, #tpu.memory_space<vmem>>, %arg4: memref<128x128xbf16, #tpu.memory_space<vmem>>, %arg5: memref<1x128xf32, #tpu.memory_space<vmem>>, %arg6: memref<128x128xbf16, #tpu.memory_space<vmem>>, %arg7: memref<1x128xf32, #tpu.memory_space<vmem>>, %arg8: memref<64x128xf32, #tpu.memory_space<vmem>>) attributes {dimension_semantics = [#tpu.dimension_semantics<parallel>], iteration_bounds = array<i64: 1>, scalar_prefetch = 0 : i64, scratch_operands = 0 : i64, tpu.core_type = #tpu.core_type<tc>, window_params = [{transform_indices = @transform_0, window_bounds = array<i64: 64, 2>}, {pipeline_mode = #tpu.pipeline_mode<synchronous>, transform_indices = @transform_1, window_bounds = array<i64: 2, 128>}, {pipeline_mode = #tpu.pipeline_mode<synchronous>, transform_indices = @transform_2, window_bounds = array<i64: 1, 128>}, {pipeline_mode = #tpu.pipeline_mode<synchronous>, transform_indices = @transform_3, window_bounds = array<i64: 128, 128>}, {pipeline_mode = #tpu.pipeline_mode<synchronous>, transform_indices = @transform_4, window_bounds = array<i64: 1, 128>}, {pipeline_mode = #tpu.pipeline_mode<synchronous>, transform_indices = @transform_5, window_bounds = array<i64: 128, 128>}, {pipeline_mode = #tpu.pipeline_mode<synchronous>, transform_indices = @transform_6, window_bounds = array<i64: 1, 128>}, {transform_indices = @transform_7, window_bounds = array<i64: 64, 128>}]} {
    %c0 = arith.constant 0 : index
    %c0_0 = arith.constant 0 : index
    %0 = vector.load %arg1[%c0, %c0_0] : memref<64x2xf32, #tpu.memory_space<vmem>>, vector<64x2xf32>
    %c0_1 = arith.constant 0 : index
    %c0_2 = arith.constant 0 : index
    %1 = vector.load %arg2[%c0_1, %c0_2] : memref<2x128xf32, #tpu.memory_space<vmem>>, vector<2x128xf32>
    %2 = vector.extract_strided_slice %0 {offsets = [0, 0], sizes = [64, 1], strides = [1, 1]} : vector<64x2xf32> to vector<64x1xf32>
    %3 = vector.extract_strided_slice %1 {offsets = [0, 0], sizes = [1, 128], strides = [1, 1]} : vector<2x128xf32> to vector<1x128xf32>
    %4 = vector.broadcast %2 : vector<64x1xf32> to vector<64x128xf32>
    %5 = vector.broadcast %3 : vector<1x128xf32> to vector<64x128xf32>
    %6 = arith.mulf %4, %5 : vector<64x128xf32>
    %7 = vector.extract_strided_slice %0 {offsets = [0, 1], sizes = [64, 1], strides = [1, 1]} : vector<64x2xf32> to vector<64x1xf32>
    %8 = vector.extract_strided_slice %1 {offsets = [1, 0], sizes = [1, 128], strides = [1, 1]} : vector<2x128xf32> to vector<1x128xf32>
    %9 = vector.broadcast %7 : vector<64x1xf32> to vector<64x128xf32>
    %10 = vector.broadcast %8 : vector<1x128xf32> to vector<64x128xf32>
    %11 = arith.mulf %9, %10 : vector<64x128xf32>
    %12 = arith.addf %6, %11 : vector<64x128xf32>
    %c0_3 = arith.constant 0 : index
    %c0_4 = arith.constant 0 : index
    %13 = vector.load %arg3[%c0_3, %c0_4] : memref<1x128xf32, #tpu.memory_space<vmem>>, vector<1x128xf32>
    %14 = vector.broadcast %13 : vector<1x128xf32> to vector<64x128xf32>
    %15 = arith.addf %12, %14 : vector<64x128xf32>
    %cst = arith.constant 0.000000e+00 : f32
    %16 = vector.broadcast %cst : f32 to vector<64x128xf32>
    %17 = arith.maximumf %15, %16 : vector<64x128xf32>
    %18 = arith.truncf %17 : vector<64x128xf32> to vector<64x128xbf16>
    %c0_5 = arith.constant 0 : index
    %c0_6 = arith.constant 0 : index
    %19 = vector.load %arg4[%c0_5, %c0_6] : memref<128x128xbf16, #tpu.memory_space<vmem>>, vector<128x128xbf16>
    %cst_7 = arith.constant dense<0.000000e+00> : vector<64x128xf32>
    %20 = tpu.matmul %18, %19, %cst_7 {dimension_numbers = #tpu.dot_dimension_numbers<[1], [0], [0], [1], [0, 0, 1, 1], [], []>} : vector<64x128xbf16>, vector<128x128xbf16>, vector<64x128xf32> -> vector<64x128xf32>
    %c0_8 = arith.constant 0 : index
    %c0_9 = arith.constant 0 : index
    %21 = vector.load %arg5[%c0_8, %c0_9] : memref<1x128xf32, #tpu.memory_space<vmem>>, vector<1x128xf32>
    %22 = vector.broadcast %21 : vector<1x128xf32> to vector<64x128xf32>
    %23 = arith.addf %20, %22 : vector<64x128xf32>
    %cst_10 = arith.constant 0.000000e+00 : f32
    %24 = vector.broadcast %cst_10 : f32 to vector<64x128xf32>
    %25 = arith.maximumf %23, %24 : vector<64x128xf32>
    %26 = arith.truncf %25 : vector<64x128xf32> to vector<64x128xbf16>
    %c0_11 = arith.constant 0 : index
    %c0_12 = arith.constant 0 : index
    %27 = vector.load %arg6[%c0_11, %c0_12] : memref<128x128xbf16, #tpu.memory_space<vmem>>, vector<128x128xbf16>
    %cst_13 = arith.constant dense<0.000000e+00> : vector<64x128xf32>
    %28 = tpu.matmul %26, %27, %cst_13 {dimension_numbers = #tpu.dot_dimension_numbers<[1], [0], [0], [1], [0, 0, 1, 1], [], []>} : vector<64x128xbf16>, vector<128x128xbf16>, vector<64x128xf32> -> vector<64x128xf32>
    %c0_14 = arith.constant 0 : index
    %c0_15 = arith.constant 0 : index
    %29 = vector.load %arg7[%c0_14, %c0_15] : memref<1x128xf32, #tpu.memory_space<vmem>>, vector<1x128xf32>
    %30 = vector.broadcast %29 : vector<1x128xf32> to vector<64x128xf32>
    %31 = arith.addf %28, %30 : vector<64x128xf32>
    %c0_16 = arith.constant 0 : index
    %c0_17 = arith.constant 0 : index
    %32 = vector.load %arg8[%c0_16, %c0_17] : memref<64x128xf32, #tpu.memory_space<vmem>>, vector<64x128xf32>
    tpu.vector_store %arg8[%c0_16, %c0_17], %31 {strides = array<i32>} : memref<64x128xf32, #tpu.memory_space<vmem>>, vector<64x128xf32>,
    return
  }
  func.func @transform_0(%arg0: i32) -> (i32, i32) {
    %c0_i32 = arith.constant 0 : i32
    %c0_i32_0 = arith.constant 0 : i32
    return %arg0, %c0_i32 : i32, i32
  }
  func.func @transform_1(%arg0: i32) -> (i32, i32) {
    %c0_i32 = arith.constant 0 : i32
    %c0_i32_0 = arith.constant 0 : i32
    %c0_i32_1 = arith.constant 0 : i32
    return %c0_i32, %c0_i32_0 : i32, i32
  }
  func.func @transform_2(%arg0: i32) -> (i32, i32) {
    %c0_i32 = arith.constant 0 : i32
    %c0_i32_0 = arith.constant 0 : i32
    %c0_i32_1 = arith.constant 0 : i32
    return %c0_i32, %c0_i32_0 : i32, i32
  }
  func.func @transform_3(%arg0: i32) -> (i32, i32) {
    %c0_i32 = arith.constant 0 : i32
    %c0_i32_0 = arith.constant 0 : i32
    %c0_i32_1 = arith.constant 0 : i32
    return %c0_i32, %c0_i32_0 : i32, i32
  }
  func.func @transform_4(%arg0: i32) -> (i32, i32) {
    %c0_i32 = arith.constant 0 : i32
    %c0_i32_0 = arith.constant 0 : i32
    %c0_i32_1 = arith.constant 0 : i32
    return %c0_i32, %c0_i32_0 : i32, i32
  }
  func.func @transform_5(%arg0: i32) -> (i32, i32) {
    %c0_i32 = arith.constant 0 : i32
    %c0_i32_0 = arith.constant 0 : i32
    %c0_i32_1 = arith.constant 0 : i32
    return %c0_i32, %c0_i32_0 : i32, i32
  }
  func.func @transform_6(%arg0: i32) -> (i32, i32) {
    %c0_i32 = arith.constant 0 : i32
    %c0_i32_0 = arith.constant 0 : i32
    %c0_i32_1 = arith.constant 0 : i32
    return %c0_i32, %c0_i32_0 : i32, i32
  }
  func.func @transform_7(%arg0: i32) -> (i32, i32) {
    %c0_i32 = arith.constant 0 : i32
    %c0_i32_0 = arith.constant 0 : i32
    return %arg0, %c0_i32 : i32, i32
  }
}

</mosaic_0001>

<llo_original>
// kernel: neural_net_forward.1
$region0: #{neural_net_forward.1}
  #allocation0 [shape = 'u32[]', space=smem, size = 0x4, offset = 0x4, fixed_abs, tag = 'smem constant byte address 0x4 - core index']
  #allocation1 [shape = 'u32[72,128]{1,0:T(1,128)}', space=vmem, size = 0x9000, scoped, tag = 'internal scratch']
  %s0 = inlined_call_operand.vmem [shape: f32[64,2], index: 0, kind: input, shape index: {}]
  %s1 = inlined_call_operand.vmem [shape: f32[2,128], index: 1, kind: input, shape index: {}]
  %s2 = inlined_call_operand.vmem [shape: f32[1,128], index: 2, kind: input, shape index: {}]
  %s3 = inlined_call_operand.vmem [shape: bf16[128,128], index: 3, kind: input, shape index: {}]
  %s4 = inlined_call_operand.vmem [shape: f32[1,128], index: 4, kind: input, shape index: {}]
  %s5 = inlined_call_operand.vmem [shape: bf16[128,128], index: 5, kind: input, shape index: {}]
  %s6 = inlined_call_operand.vmem [shape: f32[1,128], index: 6, kind: input, shape index: {}]
  %s7 = inlined_call_operand.vmem [shape: f32[64,128], index: 7, kind: output, shape index: {}]
  %s8 = sld [smem:[#allocation0]]
  $region38: #{neural_net_forward.1} parent=0
    _
  %s10 = ssub.s32 1, %s8
  %s11 = scalar_select 0, %s10, %s8
  // Predicated region
  $region2: #{neural_net_forward.1} parent=0 // pred_check
    _
  $region3: #{neural_net_forward.1} parent=0 // pred_check_branch
    %13 = sbr.rel (0) target = $region5
  $region4: #{neural_net_forward.1} parent=0 // pred_region
    _
  $region5: #{neural_net_forward.1} parent=0 // pred_fallthru
    _
  // Predicated region
  $region6: #{neural_net_forward.1} parent=0 // pred_check
    _
  $region7: #{neural_net_forward.1} parent=0 // pred_check_branch
    %15 = sbr.rel (0) target = $region9
  $region8: #{neural_net_forward.1} parent=0 // pred_region
    _
  $region9: #{neural_net_forward.1} parent=0 // pred_fallthru
    _
  // Predicated region
  $region10: #{neural_net_forward.1} parent=0 // pred_check
    _
  $region11: #{neural_net_forward.1} parent=0 // pred_check_branch
    %17 = sbr.rel (0) target = $region13
  $region12: #{neural_net_forward.1} parent=0 // pred_region
    _
  $region13: #{neural_net_forward.1} parent=0 // pred_fallthru
    _
  // Predicated region
  $region14: #{neural_net_forward.1} parent=0 // pred_check
    _
  $region15: #{neural_net_forward.1} parent=0 // pred_check_branch
    %19 = sbr.rel (0) target = $region17
  $region16: #{neural_net_forward.1} parent=0 // pred_region
    _
  $region17: #{neural_net_forward.1} parent=0 // pred_fallthru
    _
  // Predicated region
  $region18: #{neural_net_forward.1} parent=0 // pred_check
    _
  $region19: #{neural_net_forward.1} parent=0 // pred_check_branch
    %21 = sbr.rel (0) target = $region21
  $region20: #{neural_net_forward.1} parent=0 // pred_region
    _
  $region21: #{neural_net_forward.1} parent=0 // pred_fallthru
    _
  // Predicated region
  $region22: #{neural_net_forward.1} parent=0 // pred_check
    _
  $region23: #{neural_net_forward.1} parent=0 // pred_check_branch
    %23 = sbr.rel (0) target = $region25
  $region24: #{neural_net_forward.1} parent=0 // pred_region
    _
  $region25: #{neural_net_forward.1} parent=0 // pred_fallthru
    _
  // Predicated region
  $region26: #{neural_net_forward.1} parent=0 // pred_check
    _
  $region27: #{neural_net_forward.1} parent=0 // pred_check_branch
    %25 = sbr.rel (0) target = $region29
  $region28: #{neural_net_forward.1} parent=0 // pred_region
    _
  $region29: #{neural_net_forward.1} parent=0 // pred_fallthru
    _
  %v26 = vld [vmem:[%s0] sm:$0xff]
  %v27 = vld [vmem:[%s0 + $0x8] sm:$0xff]
  %v28 = vld [vmem:[%s0 + $0x10] sm:$0xff]
  %v29 = vld [vmem:[%s0 + $0x18] sm:$0xff]
  %v30 = vld [vmem:[%s0 + $0x20] sm:$0xff]
  %v31 = vld [vmem:[%s0 + $0x28] sm:$0xff]
  %v32 = vld [vmem:[%s0 + $0x30] sm:$0xff]
  %v33 = vld [vmem:[%s0 + $0x38] sm:$0xff]
  %v34 = vld [vmem:[%s1] sm:$0x3]
  %36 = vset.pattern.permute.xlu0 0
  %37 = vperm.xlu0 %36, %v26
  %v38 = vpop.permute.xlu0 %37
  %41 = vset.pattern.permute.xlu0 0
  %42 = vperm.xlu0 %41, %v27
  %v43 = vpop.permute.xlu0 %42
  %46 = vset.pattern.permute.xlu0 0
  %47 = vperm.xlu0 %46, %v28
  %v48 = vpop.permute.xlu0 %47
  %51 = vset.pattern.permute.xlu0 0
  %52 = vperm.xlu0 %51, %v29
  %v53 = vpop.permute.xlu0 %52
  %56 = vset.pattern.permute.xlu0 0
  %57 = vperm.xlu0 %56, %v30
  %v58 = vpop.permute.xlu0 %57
  %61 = vset.pattern.permute.xlu0 0
  %62 = vperm.xlu0 %61, %v31
  %v63 = vpop.permute.xlu0 %62
  %66 = vset.pattern.permute.xlu0 0
  %67 = vperm.xlu0 %66, %v32
  %v68 = vpop.permute.xlu0 %67
  %71 = vset.pattern.permute.xlu0 0
  %72 = vperm.xlu0 %71, %v33
  %v73 = vpop.permute.xlu0 %72
  %v75 = vperm.slane %v34, 0
  %v76 = vmul.f32 %v38, %v75
  %v77 = vmul.f32 %v43, %v75
  %v78 = vmul.f32 %v48, %v75
  %v79 = vmul.f32 %v53, %v75
  %v80 = vmul.f32 %v58, %v75
  %v81 = vmul.f32 %v63, %v75
  %v82 = vmul.f32 %v68, %v75
  %v83 = vmul.f32 %v73, %v75
  %84 = vset.pattern.permute.xlu0 1
  %85 = vperm.xlu0 %84, %v26
  %v86 = vpop.permute.xlu0 %85
  %88 = vset.pattern.permute.xlu0 1
  %89 = vperm.xlu0 %88, %v27
  %v90 = vpop.permute.xlu0 %89
  %92 = vset.pattern.permute.xlu0 1
  %93 = vperm.xlu0 %92, %v28
  %v94 = vpop.permute.xlu0 %93
  %96 = vset.pattern.permute.xlu0 1
  %97 = vperm.xlu0 %96, %v29
  %v98 = vpop.permute.xlu0 %97
  %100 = vset.pattern.permute.xlu0 1
  %101 = vperm.xlu0 %100, %v30
  %v102 = vpop.permute.xlu0 %101
  %104 = vset.pattern.permute.xlu0 1
  %105 = vperm.xlu0 %104, %v31
  %v106 = vpop.permute.xlu0 %105
  %108 = vset.pattern.permute.xlu0 1
  %109 = vperm.xlu0 %108, %v32
  %v110 = vpop.permute.xlu0 %109
  %112 = vset.pattern.permute.xlu0 1
  %113 = vperm.xlu0 %112, %v33
  %v114 = vpop.permute.xlu0 %113
  %v116 = vperm.slane %v34, 1
  %v117 = vmul.f32 %v86, %v116
  %v118 = vmul.f32 %v90, %v116
  %v119 = vmul.f32 %v94, %v116
  %v120 = vmul.f32 %v98, %v116
  %v121 = vmul.f32 %v102, %v116
  %v122 = vmul.f32 %v106, %v116
  %v123 = vmul.f32 %v110, %v116
  %v124 = vmul.f32 %v114, %v116
  %v125 = vadd.f32 %v76, %v117
  %v126 = vadd.f32 %v77, %v118
  %v127 = vadd.f32 %v78, %v119
  %v128 = vadd.f32 %v79, %v120
  %v129 = vadd.f32 %v80, %v121
  %v130 = vadd.f32 %v81, %v122
  %v131 = vadd.f32 %v82, %v123
  %v132 = vadd.f32 %v83, %v124
  %v133 = vld [vmem:[%s2] sm:$0x1]
  %v135 = vperm.slane %v133, 0
  %v137 = vadd.f32 %v125, %v135
  %v138 = vadd.f32 %v126, %v135
  %v139 = vadd.f32 %v127, %v135
  %v140 = vadd.f32 %v128, %v135
  %v141 = vadd.f32 %v129, %v135
  %v142 = vadd.f32 %v130, %v135
  %v143 = vadd.f32 %v131, %v135
  %v144 = vadd.f32 %v132, %v135
  %v145 = vmax.f32 %v137, 0.0
  %v146 = vmax.f32 %v138, 0.0
  %v147 = vmax.f32 %v139, 0.0
  %v148 = vmax.f32 %v140, 0.0
  %v149 = vmax.f32 %v141, 0.0
  %v150 = vmax.f32 %v142, 0.0
  %v151 = vmax.f32 %v143, 0.0
  %v152 = vmax.f32 %v144, 0.0
  %v153 = vpack.c.bf16 %v146, %v145
  %v154 = vpack.c.bf16 %v148, %v147
  %v155 = vpack.c.bf16 %v150, %v149
  %v156 = vpack.c.bf16 %v152, %v151
  %v157 = vld [vmem:[%s3] sm:$0xf]
  %v158 = vld [vmem:[%s3 + $0x4] sm:$0xf]
  %v159 = vld [vmem:[%s3 + $0x8] sm:$0xf]
  %v160 = vld [vmem:[%s3 + $0xc] sm:$0xf]
  %v161 = vld [vmem:[%s3 + $0x10] sm:$0xf]
  %v162 = vld [vmem:[%s3 + $0x14] sm:$0xf]
  %v163 = vld [vmem:[%s3 + $0x18] sm:$0xf]
  %v164 = vld [vmem:[%s3 + $0x1c] sm:$0xf]
  %v165 = vld [vmem:[%s3 + $0x20] sm:$0xf]
  %v166 = vld [vmem:[%s3 + $0x24] sm:$0xf]
  %v167 = vld [vmem:[%s3 + $0x28] sm:$0xf]
  %v168 = vld [vmem:[%s3 + $0x2c] sm:$0xf]
  %v169 = vld [vmem:[%s3 + $0x30] sm:$0xf]
  %v170 = vld [vmem:[%s3 + $0x34] sm:$0xf]
  %v171 = vld [vmem:[%s3 + $0x38] sm:$0xf]
  %v172 = vld [vmem:[%s3 + $0x3c] sm:$0xf]
  %v173 = vld [vmem:[%s4] sm:$0x1]
  %v175 = vperm.slane %v173, 0
  %v193 = vunpack.c.l.b16 %v157
  %v194 = vunpack.c.l.b16 %v158
  %v195 = vunpack.c.l.b16 %v159
  %v196 = vunpack.c.l.b16 %v160
  %v197 = vunpack.c.l.b16 %v161
  %v198 = vunpack.c.l.b16 %v162
  %v199 = vunpack.c.l.b16 %v163
  %v200 = vunpack.c.l.b16 %v164
  %v201 = vunpack.c.l.b16 %v165
  %v202 = vunpack.c.l.b16 %v166
  %v203 = vunpack.c.l.b16 %v167
  %v204 = vunpack.c.l.b16 %v168
  %v205 = vunpack.c.l.b16 %v169
  %v206 = vunpack.c.l.b16 %v170
  %v207 = vunpack.c.l.b16 %v171
  %v208 = vunpack.c.l.b16 %v172
  %v209 = vpack.c.b16 %v194, %v193
  %v210 = vpack.c.b16 %v196, %v195
  %v211 = vpack.c.b16 %v198, %v197
  %v212 = vpack.c.b16 %v200, %v199
  %v213 = vpack.c.b16 %v202, %v201
  %v214 = vpack.c.b16 %v204, %v203
  %v215 = vpack.c.b16 %v206, %v205
  %v216 = vpack.c.b16 %v208, %v207
  %225 = vmatpush.bf16.msra.mxu0 %v216
  %226 = vmatpush.bf16.msra.mxu0 %v215
  %227 = vmatpush.bf16.msra.mxu0 %v214
  %228 = vmatpush.bf16.msra.mxu0 %v213
  %229 = vmatpush.bf16.msra.mxu0 %v212
  %230 = vmatpush.bf16.msra.mxu0 %v211
  %231 = vmatpush.bf16.msra.mxu0 %v210
  %232 = vmatpush.bf16.msra.mxu0 %v209
  %233 = vmatmul.bf16.gmra.mxu0 %v153
  %v234 = vpop.f32.mrf.mxu0
  %v235 = vadd.f32 %v175, %v234
  %v236 = vpop.f32.mrf.mxu0
  %v237 = vadd.f32 %v175, %v236
  %238 = vmatmul.bf16.gmra.mxu0 %v154
  %v239 = vpop.f32.mrf.mxu0
  %v240 = vadd.f32 %v175, %v239
  %v241 = vpop.f32.mrf.mxu0
  %v242 = vadd.f32 %v175, %v241
  %243 = vmatmul.bf16.gmra.mxu0 %v155
  %v244 = vpop.f32.mrf.mxu0
  %v245 = vadd.f32 %v175, %v244
  %v246 = vpop.f32.mrf.mxu0
  %v247 = vadd.f32 %v175, %v246
  %248 = vmatmul.bf16.gmra.mxu0 %v156
  %v249 = vpop.f32.mrf.mxu0
  %v250 = vadd.f32 %v175, %v249
  %v251 = vpop.f32.mrf.mxu0
  %v252 = vadd.f32 %v175, %v251
  %253 = vdwg.mxu0
  %v254 = vmax.f32 %v235, 0.0
  %v255 = vmax.f32 %v237, 0.0
  %v256 = vmax.f32 %v240, 0.0
  %v257 = vmax.f32 %v242, 0.0
  %v258 = vmax.f32 %v245, 0.0
  %v259 = vmax.f32 %v247, 0.0
  %v260 = vmax.f32 %v250, 0.0
  %v261 = vmax.f32 %v252, 0.0
  %v262 = vpack.c.bf16 %v255, %v254
  %v263 = vpack.c.bf16 %v257, %v256
  %v264 = vpack.c.bf16 %v259, %v258
  %v265 = vpack.c.bf16 %v261, %v260
  %v266 = vld [vmem:[%s5] sm:$0xf]
  %v267 = vld [vmem:[%s5 + $0x4] sm:$0xf]
  %v268 = vld [vmem:[%s5 + $0x8] sm:$0xf]
  %v269 = vld [vmem:[%s5 + $0xc] sm:$0xf]
  %v270 = vld [vmem:[%s5 + $0x10] sm:$0xf]
  %v271 = vld [vmem:[%s5 + $0x14] sm:$0xf]
  %v272 = vld [vmem:[%s5 + $0x18] sm:$0xf]
  %v273 = vld [vmem:[%s5 + $0x1c] sm:$0xf]
  %v274 = vld [vmem:[%s5 + $0x20] sm:$0xf]
  %v275 = vld [vmem:[%s5 + $0x24] sm:$0xf]
  %v276 = vld [vmem:[%s5 + $0x28] sm:$0xf]
  %v277 = vld [vmem:[%s5 + $0x2c] sm:$0xf]
  %v278 = vld [vmem:[%s5 + $0x30] sm:$0xf]
  %v279 = vld [vmem:[%s5 + $0x34] sm:$0xf]
  %v280 = vld [vmem:[%s5 + $0x38] sm:$0xf]
  %v281 = vld [vmem:[%s5 + $0x3c] sm:$0xf]
  %v282 = vld [vmem:[%s6] sm:$0x1]
  %v284 = vperm.slane %v282, 0
  %v302 = vunpack.c.l.b16 %v266
  %v303 = vunpack.c.l.b16 %v267
  %v304 = vunpack.c.l.b16 %v268
  %v305 = vunpack.c.l.b16 %v269
  %v306 = vunpack.c.l.b16 %v270
  %v307 = vunpack.c.l.b16 %v271
  %v308 = vunpack.c.l.b16 %v272
  %v309 = vunpack.c.l.b16 %v273
  %v310 = vunpack.c.l.b16 %v274
  %v311 = vunpack.c.l.b16 %v275
  %v312 = vunpack.c.l.b16 %v276
  %v313 = vunpack.c.l.b16 %v277
  %v314 = vunpack.c.l.b16 %v278
  %v315 = vunpack.c.l.b16 %v279
  %v316 = vunpack.c.l.b16 %v280
  %v317 = vunpack.c.l.b16 %v281
  %v318 = vpack.c.b16 %v303, %v302
  %v319 = vpack.c.b16 %v305, %v304
  %v320 = vpack.c.b16 %v307, %v306
  %v321 = vpack.c.b16 %v309, %v308
  %v322 = vpack.c.b16 %v311, %v310
  %v323 = vpack.c.b16 %v313, %v312
  %v324 = vpack.c.b16 %v315, %v314
  %v325 = vpack.c.b16 %v317, %v316
  %334 = vmatpush.bf16.msra.mxu0 %v325
  %335 = vmatpush.bf16.msra.mxu0 %v324
  %336 = vmatpush.bf16.msra.mxu0 %v323
  %337 = vmatpush.bf16.msra.mxu0 %v322
  %338 = vmatpush.bf16.msra.mxu0 %v321
  %339 = vmatpush.bf16.msra.mxu0 %v320
  %340 = vmatpush.bf16.msra.mxu0 %v319
  %341 = vmatpush.bf16.msra.mxu0 %v318
  %342 = vmatmul.bf16.gmra.mxu0 %v262
  %v343 = vpop.f32.mrf.mxu0
  %v344 = vadd.f32 %v284, %v343
  %v345 = vpop.f32.mrf.mxu0
  %v346 = vadd.f32 %v284, %v345
  %347 = vmatmul.bf16.gmra.mxu0 %v263
  %v348 = vpop.f32.mrf.mxu0
  %v349 = vadd.f32 %v284, %v348
  %v350 = vpop.f32.mrf.mxu0
  %v351 = vadd.f32 %v284, %v350
  %352 = vmatmul.bf16.gmra.mxu0 %v264
  %v353 = vpop.f32.mrf.mxu0
  %v354 = vadd.f32 %v284, %v353
  %v355 = vpop.f32.mrf.mxu0
  %v356 = vadd.f32 %v284, %v355
  %357 = vmatmul.bf16.gmra.mxu0 %v265
  %v358 = vpop.f32.mrf.mxu0
  %v359 = vadd.f32 %v284, %v358
  %v360 = vpop.f32.mrf.mxu0
  %v361 = vadd.f32 %v284, %v360
  %362 = vdwg.mxu0
  %363 = vst [vmem:[%s7] sm:$0xff] %v344
  %364 = vst [vmem:[%s7 + $0x8] sm:$0xff] %v346
  %365 = vst [vmem:[%s7 + $0x10] sm:$0xff] %v349
  %366 = vst [vmem:[%s7 + $0x18] sm:$0xff] %v351
  %367 = vst [vmem:[%s7 + $0x20] sm:$0xff] %v354
  %368 = vst [vmem:[%s7 + $0x28] sm:$0xff] %v356
  %369 = vst [vmem:[%s7 + $0x30] sm:$0xff] %v359
  %370 = vst [vmem:[%s7 + $0x38] sm:$0xff] %v361
  // Predicated region
  $region30: #{neural_net_forward.1} parent=0 // pred_check
    _
  $region31: #{neural_net_forward.1} parent=0 // pred_check_branch
    %372 = sbr.rel (0) target = $region33
  $region32: #{neural_net_forward.1} parent=0 // pred_region
    _
  $region33: #{neural_net_forward.1} parent=0 // pred_fallthru
    _
  // Predicated region
  $region34: #{neural_net_forward.1} parent=0 // pred_check
    _
  $region35: #{neural_net_forward.1} parent=0 // pred_check_branch
    %374 = sbr.rel (0) target = $region37
  $region36: #{neural_net_forward.1} parent=0 // pred_region
    _
  $region37: #{neural_net_forward.1} parent=0 // pred_fallthru
    _

</llo_original>
